<compile_context>
chip_gen: v7x
topology: tpu7x:2x2x1
jax: 0.10.0
libtpu: 0.0.40
codegen_flags: <defaults>
</compile_context>

<pallas_src>
import functools

import jax
import jax.numpy as jnp
from jax.experimental import pallas as pl
from jax.experimental.pallas import tpu as pltpu


# ---------------------------------------------------------------------------
# Kernel
# ---------------------------------------------------------------------------
def _dino_loss_kernel(t_ref, s_ref, c_ref,                 # inputs
                      loss_part_ref, tsum_ref,             # outputs (per batch tile)
                      t_sm_scr, tsum_sm_scr, loss_acc,     # VMEM scratch
                      *, student_temp, teacher_temp,
                      n_teacher_views, n_student_views, n_diag, cache_dtype):
    si = pl.program_id(1)
    inv_ts = 1.0 / student_temp
    inv_tt = 1.0 / teacher_temp

    # ---- once per batch tile (si == 0): per-view teacher softmax into the
    # ---- cache, running T_sum of probabilities, raw-logit sum for the center
    # ---- update, accumulator init.  Views are processed one at a time so
    # ---- compiler temporaries stay bounded at a few (TB, D) buffers.
    @pl.when(si == 0)
    def _setup():
        loss_acc[...] = jnp.zeros_like(loss_acc)
        c = c_ref[...].astype(jnp.float32)                 # (1, D)
        p_sum = None
        raw_sum = None
        for ti in range(n_teacher_views):                  # Vt tiny: unrolled
            t_v = t_ref[ti].astype(jnp.float32)            # (TB, D)
            r = jnp.sum(t_v, axis=0, keepdims=True)        # (1, D) raw row-sum
            raw_sum = r if raw_sum is None else raw_sum + r
            logits = (t_v - c) * inv_tt
            logits = logits - jnp.max(logits, axis=-1, keepdims=True)
            e = jnp.exp(logits)
            p = e * pl.reciprocal(jnp.sum(e, axis=-1, keepdims=True))
            if ti < n_diag:                                # needed for ti == si
                t_sm_scr[ti] = p.astype(cache_dtype)
            p_sum = p if p_sum is None else p_sum + p
        tsum_sm_scr[...] = p_sum.astype(cache_dtype)
        tsum_ref[0] = raw_sum

    # ---- per student view: one shifted-logit pass; since sum_d(t_sm) == 1,
    # ---- -t . log_softmax(s) = logZ - t . s_shift, so the contribution of all
    # ---- teacher views is Vt*logZ - <T_sum, s_shift> plus a single diagonal
    # ---- correction for the skipped ti == si pair.
    s_shift = s_ref[0].astype(jnp.float32) * inv_ts        # (TB, D)
    s_shift = s_shift - jnp.max(s_shift, axis=-1, keepdims=True)
    logz = jnp.log(jnp.sum(jnp.exp(s_shift), axis=-1, keepdims=True))  # (TB, 1)
    dot_all = jnp.sum(tsum_sm_scr[...].astype(jnp.float32) * s_shift,
                      axis=-1, keepdims=True)              # (TB, 1)
    loss_acc[...] += float(n_teacher_views) * logz - dot_all
    for ti in range(n_diag):                               # tiny: unrolled
        @pl.when(si == ti)                                 # remove ti == si pair
        def _diag(ti=ti):
            d = jnp.sum(t_sm_scr[ti].astype(jnp.float32) * s_shift,
                        axis=-1, keepdims=True)
            loss_acc[...] += d - logz

    # ---- finalize this batch tile: single sublane reduce + lane-dense store.
    @pl.when(si == n_student_views - 1)
    def _finalize():
        loss_part_ref[...] = (jnp.zeros_like(loss_part_ref)
                              + jnp.sum(loss_acc[...]))


# ---------------------------------------------------------------------------
# VMEM accounting / tile choice
# ---------------------------------------------------------------------------
def _vmem_capacity_bytes():
    try:
        return int(pltpu.get_tpu_info().vmem_capacity_bytes)
    except Exception:
        return 64 * 1024 * 1024   # conservative fallback (v7x per-core VMEM)


def _bytes_per_row(D, Vt, in_itemsize, student_buffers=2):
    # Resident VMEM per batch-tile row (bytes):
    #   pipelined input buffers : teacher (2 bufs, Vt views) + student (k bufs)
    #   scratch caches          : per-view softmax (<=Vt) + T_sum (1), f32-sized
    #   compiler temporaries    : ~5 live (TB, D) f32 arrays in setup / CE
    return (in_itemsize * D * (2 * Vt + student_buffers)
            + 4 * D * (Vt + 1)
            + 4 * D * 5)


def _choose_tb(B, D, Vt, in_itemsize, budget_bytes, granule, min_tiles=2,
               student_buffers=2):
    bpr = _bytes_per_row(D, Vt, in_itemsize, student_buffers)
    cap = max(0, budget_bytes // max(bpr, 1))
    # Prefer >= min_tiles batch tiles so the "parallel" batch axis can feed
    # both TensorCores on v7x; cost on 1-TC chips is one extra grid step.
    if B >= min_tiles * granule:
        cap = min(cap, B // min_tiles)
    if cap >= B:
        return B
    tb = (min(cap, B) // granule) * granule
    while tb >= granule and B % tb:
        tb -= granule
    if tb >= granule:
        return tb
    if B * bpr <= budget_bytes:
        return B          # B not granule-divisible, but the whole batch fits
    # TODO(synk): pad the batch (and mask the padded rows) instead of failing
    # when no granule-aligned divisor of B fits the VMEM budget.
    raise ValueError(
        f"DINO loss kernel: batch {B} cannot be tiled within the VMEM budget "
        f"({budget_bytes} bytes, {bpr} bytes/row); pad the batch to a multiple "
        f"of {granule}.")


# ---------------------------------------------------------------------------
# Wrapper
# ---------------------------------------------------------------------------
def dino_loss_pallas(student_output, teacher_output, center, *,
                     student_temp=0.1, teacher_temp=0.04,
                     center_momentum=0.9, block_batch=None,
                     cache_dtype=jnp.float32, student_buffers=2):
    """Returns (total_loss scalar, updated center (1, D))."""
    Vs, B, D = student_output.shape
    Vt, Bt, Dt = teacher_output.shape
    assert (B, D) == (Bt, Dt)
    n_loss_terms = Vs * Vt - min(Vs, Vt)
    assert n_loss_terms > 0
    n_diag = min(Vs, Vt)

    in_itemsize = max(jnp.dtype(student_output.dtype).itemsize,
                      jnp.dtype(teacher_output.dtype).itemsize)
    # Sub-32-bit inputs pack two rows per sublane: use a 16-row batch granule.
    granule = 16 if in_itemsize < 4 else 8

    vmem_cap = _vmem_capacity_bytes()
    budget = int(0.70 * vmem_cap)      # generation-aware (128 MiB vs 64 MiB)
    if block_batch is not None:
        tb = block_batch
    else:
        tb = _choose_tb(B, D, Vt, in_itemsize, budget, granule,
                        student_buffers=student_buffers)
    assert B % tb == 0, (B, tb)
    assert tb == B or tb % 8 == 0, tb
    n_b_tiles = B // tb

    est_bytes = (_bytes_per_row(D, Vt, in_itemsize, student_buffers) * tb
                 + 16 * D)             # + outputs / resident center slack
    vmem_limit = int(max(32 << 20, est_bytes + (8 << 20)))
    vmem_limit = int(min(vmem_limit, int(0.9 * vmem_cap)))

    if student_buffers == 2:
        s_spec = pl.BlockSpec((1, tb, D), lambda b, si: (si, b, 0))
    else:
        # Optional lever if xprof shows exposed DMA at batch-tile boundaries.
        s_spec = pl.BlockSpec((1, tb, D), lambda b, si: (si, b, 0),
                              pipeline_mode=pl.Buffered(student_buffers))

    kernel = functools.partial(
        _dino_loss_kernel,
        student_temp=float(student_temp),
        teacher_temp=float(teacher_temp),
        n_teacher_views=Vt,
        n_student_views=Vs,
        n_diag=n_diag,
        cache_dtype=cache_dtype,
    )

    loss_part, tsum_part = pl.pallas_call(
        kernel,
        out_shape=(
            jax.ShapeDtypeStruct((n_b_tiles, 1, 128), jnp.float32),  # loss part
            jax.ShapeDtypeStruct((n_b_tiles, 1, D), jnp.float32),    # teacher sum
        ),
        grid_spec=pltpu.PrefetchScalarGridSpec(
            num_scalar_prefetch=0,
            grid=(n_b_tiles, Vs),
            in_specs=[
                # Teacher: all Vt views of this batch tile, constant across si
                # (fetched once per batch tile).
                pl.BlockSpec((Vt, tb, D), lambda b, si: (0, b, 0)),
                # Student: one view's batch tile per step (each read once).
                s_spec,
                # Center: resident for the whole grid.
                pl.BlockSpec((1, D), lambda b, si: (0, 0)),
            ],
            out_specs=(
                pl.BlockSpec((1, 1, 128), lambda b, si: (b, 0, 0)),
                pl.BlockSpec((1, 1, D), lambda b, si: (b, 0, 0)),
            ),
            scratch_shapes=[
                pltpu.VMEM((n_diag, tb, D), cache_dtype),  # per-view softmax
                pltpu.VMEM((tb, D), cache_dtype),          # T_sum cache
                pltpu.VMEM((tb, 1), jnp.float32),          # per-row loss acc
            ],
        ),
        compiler_params=pltpu.CompilerParams(
            dimension_semantics=("parallel", "arbitrary"),
            vmem_limit_bytes=vmem_limit),
    )(teacher_output, student_output, center)

    # Final scalar reductions / scales in the wrapper (once, not per grid step).
    loss = jnp.sum(loss_part[:, 0, 0]) / (float(B) * float(n_loss_terms))
    batch_center = jnp.sum(tsum_part[:, 0, :], axis=0,
                           keepdims=True) / (float(Vt) * float(B))
    new_center = (center.astype(jnp.float32) * center_momentum
                  + batch_center * (1.0 - center_momentum))
    # TODO(synk): multi-host DINO all-reduces batch_center across devices; that
    # collective stays outside this per-device kernel.
    return loss, new_center


# ---------------------------------------------------------------------------
# Pure-JAX reference matching the PyTorch module semantics
# ---------------------------------------------------------------------------
def dino_loss_ref(student_output, teacher_output, center, *,
                  student_temp=0.1, teacher_temp=0.04, center_momentum=0.9):
    Vs, B, D = student_output.shape
    Vt = teacher_output.shape[0]
    s_logsm = jax.nn.log_softmax(student_output / student_temp, axis=-1)
    t_sm = jax.nn.softmax((teacher_output - center[None]) / teacher_temp,
                          axis=-1)
    total = 0.0
    n = 0
    for ti in range(Vt):
        for si in range(Vs):
            if ti == si:
                continue
            total = total + jnp.mean(jnp.sum(-t_sm[ti] * s_logsm[si], axis=-1))
            n += 1
    loss = total / n
    batch_center = jnp.mean(teacher_output.reshape(-1, D), axis=0,
                            keepdims=True)
    new_center = center * center_momentum + batch_center * (1 - center_momentum)
    return loss, new_center


if __name__ == "__main__":
    # Small but representative: 4 student views, 2 teacher views, batch 16,
    # out_dim 256.  The auto tile chooser picks tb=8 (two batch tiles) in the
    # f32 run, exercising the tiled / "parallel" batch axis and the per-tile
    # partial outputs.
    Vs, Vt, B, D = 4, 2, 16, 256
    key = jax.random.PRNGKey(0)
    ks, kt = jax.random.split(key)
    student = jax.random.normal(ks, (Vs, B, D), dtype=jnp.float32)
    teacher = jax.random.normal(kt, (Vt, B, D), dtype=jnp.float32)
    # Module __init__ registers center = zeros(1, out_dim).
    center = jnp.zeros((1, D), dtype=jnp.float32)

    # Two forwards: the second reuses the updated center to exercise the
    # centering path and the momentum update.
    loss0, center1 = dino_loss_pallas(student, teacher, center)
    loss1, center2 = dino_loss_pallas(student, teacher, center1)
    jax.block_until_ready((loss0, center1, loss1, center2))

    rloss0, rcenter1 = dino_loss_ref(student, teacher, center)
    rloss1, rcenter2 = dino_loss_ref(student, teacher, rcenter1)
    assert jnp.allclose(loss0, rloss0, rtol=1e-4, atol=1e-5), (loss0, rloss0)
    assert jnp.allclose(center1, rcenter1, rtol=1e-4, atol=1e-6)
    assert jnp.allclose(loss1, rloss1, rtol=1e-4, atol=1e-5), (loss1, rloss1)
    assert jnp.allclose(center2, rcenter2, rtol=1e-4, atol=1e-6)

    # bf16-input path (the HBM-bandwidth lever on v5e/v6e): the kernel upcasts
    # to f32 internally, so it tracks an f32 reference on the same values.
    student_bf = student.astype(jnp.bfloat16)
    teacher_bf = teacher.astype(jnp.bfloat16)
    loss_bf, center_bf = dino_loss_pallas(student_bf, teacher_bf, center)
    jax.block_until_ready((loss_bf, center_bf))
    rloss_bf, rcenter_bf = dino_loss_ref(student_bf.astype(jnp.float32),
                                         teacher_bf.astype(jnp.float32), center)
    assert jnp.allclose(loss_bf, rloss_bf, rtol=1e-4, atol=1e-5), (loss_bf, rloss_bf)
    assert jnp.allclose(center_bf, rcenter_bf, rtol=1e-4, atol=1e-6)

    print("KERNEL_OK")
</pallas_src>

<mosaic_0001>
module attributes {stable_mosaic.version = 11 : i64} {
  func.func @_dino_loss_kernel(%arg0: i32, %arg1: i32, %arg2: memref<2x8x256xf32, #tpu.memory_space<vmem>>, %arg3: memref<1x8x256xf32, #tpu.memory_space<vmem>>, %arg4: memref<1x256xf32, #tpu.memory_space<vmem>>, %arg5: memref<1x1x128xf32, #tpu.memory_space<vmem>>, %arg6: memref<1x1x256xf32, #tpu.memory_space<vmem>>, %arg7: memref<2x8x256xf32, #tpu.memory_space<vmem>>, %arg8: memref<8x256xf32, #tpu.memory_space<vmem>>, %arg9: memref<8x1xf32, #tpu.memory_space<vmem>>) attributes {dimension_semantics = [#tpu.dimension_semantics<parallel>, #tpu.dimension_semantics<arbitrary>], iteration_bounds = array<i64: 2, 4>, scalar_prefetch = 0 : i64, scratch_operands = 3 : i64, tpu.core_type = #tpu.core_type<tc>, window_params = [{transform_indices = @transform_0, window_bounds = array<i64: 2, 8, 256>}, {transform_indices = @transform_1, window_bounds = array<i64: 1, 8, 256>}, {pipeline_mode = #tpu.pipeline_mode<synchronous>, transform_indices = @transform_2, window_bounds = array<i64: 1, 256>}, {transform_indices = @transform_3, window_bounds = array<i64: 1, 1, 128>}, {transform_indices = @transform_4, window_bounds = array<i64: 1, 1, 256>}]} {
    %c0_i32 = arith.constant 0 : i32
    %0 = arith.cmpi eq, %arg1, %c0_i32 : i32
    %1 = arith.extui %0 : i1 to i32
    %c0_i32_0 = arith.constant 0 : i32
    %2 = arith.cmpi ne, %1, %c0_i32_0 : i32
    scf.if %2 {
      %cst_17 = arith.constant 0.000000e+00 : f32
      %34 = vector.broadcast %cst_17 : f32 to vector<8x1xf32>
      %c0_18 = arith.constant 0 : index
      %c0_19 = arith.constant 0 : index
      %35 = vector.load %arg9[%c0_18, %c0_19] : memref<8x1xf32, #tpu.memory_space<vmem>>, vector<8x1xf32>
      tpu.vector_store %arg9[%c0_18, %c0_19], %34 {strides = array<i32>} : memref<8x1xf32, #tpu.memory_space<vmem>>, vector<8x1xf32>,
      %c0_20 = arith.constant 0 : index
      %c0_21 = arith.constant 0 : index
      %36 = vector.load %arg4[%c0_20, %c0_21] : memref<1x256xf32, #tpu.memory_space<vmem>>, vector<1x256xf32>
      %c0_22 = arith.constant 0 : index
      %c0_23 = arith.constant 0 : index
      %c0_24 = arith.constant 0 : index
      %37 = vector.load %arg2[%c0_22, %c0_23, %c0_24] : memref<2x8x256xf32, #tpu.memory_space<vmem>>, vector<1x8x256xf32>
      %38 = vector.shape_cast %37 : vector<1x8x256xf32> to vector<8x256xf32>
      %cst_25 = arith.constant dense<0.000000e+00> : vector<256xf32>
      %39 = vector.multi_reduction <add>, %38, %cst_25 [0] : vector<8x256xf32> to vector<256xf32>
      %40 = vector.shape_cast %39 : vector<256xf32> to vector<1x256xf32>
      %41 = vector.broadcast %36 : vector<1x256xf32> to vector<8x256xf32>
      %42 = arith.subf %38, %41 : vector<8x256xf32>
      %cst_26 = arith.constant 2.500000e+01 : f32
      %43 = vector.broadcast %cst_26 : f32 to vector<8x256xf32>
      %44 = arith.mulf %42, %43 : vector<8x256xf32>
      %cst_27 = arith.constant dense<0xFF800000> : vector<8xf32>
      %45 = vector.multi_reduction <maximumf>, %44, %cst_27 [1] : vector<8x256xf32> to vector<8xf32>
      %46 = vector.shape_cast %45 : vector<8xf32> to vector<8x1xf32>
      %47 = vector.broadcast %46 : vector<8x1xf32> to vector<8x256xf32>
      %48 = arith.subf %44, %47 : vector<8x256xf32>
      %49 = math.exp %48 : vector<8x256xf32>
      %cst_28 = arith.constant dense<0.000000e+00> : vector<8xf32>
      %50 = vector.multi_reduction <add>, %49, %cst_28 [1] : vector<8x256xf32> to vector<8xf32>
      %51 = vector.shape_cast %50 : vector<8xf32> to vector<8x1xf32>
      %52 = tpu.reciprocal %51 : vector<8x1xf32> -> vector<8x1xf32>
      %53 = vector.broadcast %52 : vector<8x1xf32> to vector<8x256xf32>
      %54 = arith.mulf %49, %53 : vector<8x256xf32>
      %c0_29 = arith.constant 0 : index
      %c0_30 = arith.constant 0 : index
      %c0_31 = arith.constant 0 : index
      %55 = vector.load %arg7[%c0_29, %c0_30, %c0_31] : memref<2x8x256xf32, #tpu.memory_space<vmem>>, vector<1x8x256xf32>
      %56 = vector.shape_cast %55 : vector<1x8x256xf32> to vector<8x256xf32>
      %57 = vector.shape_cast %54 : vector<8x256xf32> to vector<1x8x256xf32>
      tpu.vector_store %arg7[%c0_29, %c0_30, %c0_31], %57 {strides = array<i32>} : memref<2x8x256xf32, #tpu.memory_space<vmem>>, vector<1x8x256xf32>,
      %c1 = arith.constant 1 : index
      %c0_32 = arith.constant 0 : index
      %c0_33 = arith.constant 0 : index
      %58 = vector.load %arg2[%c1, %c0_32, %c0_33] : memref<2x8x256xf32, #tpu.memory_space<vmem>>, vector<1x8x256xf32>
      %59 = vector.shape_cast %58 : vector<1x8x256xf32> to vector<8x256xf32>
      %cst_34 = arith.constant dense<0.000000e+00> : vector<256xf32>
      %60 = vector.multi_reduction <add>, %59, %cst_34 [0] : vector<8x256xf32> to vector<256xf32>
      %61 = vector.shape_cast %60 : vector<256xf32> to vector<1x256xf32>
      %62 = arith.addf %40, %61 : vector<1x256xf32>
      %63 = vector.broadcast %36 : vector<1x256xf32> to vector<8x256xf32>
      %64 = arith.subf %59, %63 : vector<8x256xf32>
      %cst_35 = arith.constant 2.500000e+01 : f32
      %65 = vector.broadcast %cst_35 : f32 to vector<8x256xf32>
      %66 = arith.mulf %64, %65 : vector<8x256xf32>
      %cst_36 = arith.constant dense<0xFF800000> : vector<8xf32>
      %67 = vector.multi_reduction <maximumf>, %66, %cst_36 [1] : vector<8x256xf32> to vector<8xf32>
      %68 = vector.shape_cast %67 : vector<8xf32> to vector<8x1xf32>
      %69 = vector.broadcast %68 : vector<8x1xf32> to vector<8x256xf32>
      %70 = arith.subf %66, %69 : vector<8x256xf32>
      %71 = math.exp %70 : vector<8x256xf32>
      %cst_37 = arith.constant dense<0.000000e+00> : vector<8xf32>
      %72 = vector.multi_reduction <add>, %71, %cst_37 [1] : vector<8x256xf32> to vector<8xf32>
      %73 = vector.shape_cast %72 : vector<8xf32> to vector<8x1xf32>
      %74 = tpu.reciprocal %73 : vector<8x1xf32> -> vector<8x1xf32>
      %75 = vector.broadcast %74 : vector<8x1xf32> to vector<8x256xf32>
      %76 = arith.mulf %71, %75 : vector<8x256xf32>
      %c1_38 = arith.constant 1 : index
      %c0_39 = arith.constant 0 : index
      %c0_40 = arith.constant 0 : index
      %77 = vector.load %arg7[%c1_38, %c0_39, %c0_40] : memref<2x8x256xf32, #tpu.memory_space<vmem>>, vector<1x8x256xf32>
      %78 = vector.shape_cast %77 : vector<1x8x256xf32> to vector<8x256xf32>
      %79 = vector.shape_cast %76 : vector<8x256xf32> to vector<1x8x256xf32>
      tpu.vector_store %arg7[%c1_38, %c0_39, %c0_40], %79 {strides = array<i32>} : memref<2x8x256xf32, #tpu.memory_space<vmem>>, vector<1x8x256xf32>,
      %80 = arith.addf %54, %76 : vector<8x256xf32>
      %c0_41 = arith.constant 0 : index
      %c0_42 = arith.constant 0 : index
      %81 = vector.load %arg8[%c0_41, %c0_42] : memref<8x256xf32, #tpu.memory_space<vmem>>, vector<8x256xf32>
      tpu.vector_store %arg8[%c0_41, %c0_42], %80 {strides = array<i32>} : memref<8x256xf32, #tpu.memory_space<vmem>>, vector<8x256xf32>,
      %c0_43 = arith.constant 0 : index
      %c0_44 = arith.constant 0 : index
      %c0_45 = arith.constant 0 : index
      %82 = vector.load %arg6[%c0_43, %c0_44, %c0_45] : memref<1x1x256xf32, #tpu.memory_space<vmem>>, vector<1x1x256xf32>
      %83 = vector.shape_cast %82 : vector<1x1x256xf32> to vector<1x256xf32>
      %84 = vector.shape_cast %62 : vector<1x256xf32> to vector<1x1x256xf32>
      tpu.vector_store %arg6[%c0_43, %c0_44, %c0_45], %84 {strides = array<i32>} : memref<1x1x256xf32, #tpu.memory_space<vmem>>, vector<1x1x256xf32>,
    } else {
    }
    %c0 = arith.constant 0 : index
    %c0_1 = arith.constant 0 : index
    %c0_2 = arith.constant 0 : index
    %3 = vector.load %arg3[%c0, %c0_1, %c0_2] : memref<1x8x256xf32, #tpu.memory_space<vmem>>, vector<1x8x256xf32>
    %4 = vector.shape_cast %3 : vector<1x8x256xf32> to vector<8x256xf32>
    %cst = arith.constant 1.000000e+01 : f32
    %5 = vector.broadcast %cst : f32 to vector<8x256xf32>
    %6 = arith.mulf %4, %5 : vector<8x256xf32>
    %cst_3 = arith.constant dense<0xFF800000> : vector<8xf32>
    %7 = vector.multi_reduction <maximumf>, %6, %cst_3 [1] : vector<8x256xf32> to vector<8xf32>
    %8 = vector.shape_cast %7 : vector<8xf32> to vector<8x1xf32>
    %9 = vector.broadcast %8 : vector<8x1xf32> to vector<8x256xf32>
    %10 = arith.subf %6, %9 : vector<8x256xf32>
    %11 = math.exp %10 : vector<8x256xf32>
    %cst_4 = arith.constant dense<0.000000e+00> : vector<8xf32>
    %12 = vector.multi_reduction <add>, %11, %cst_4 [1] : vector<8x256xf32> to vector<8xf32>
    %13 = vector.shape_cast %12 : vector<8xf32> to vector<8x1xf32>
    %14 = math.log %13 : vector<8x1xf32>
    %c0_5 = arith.constant 0 : index
    %c0_6 = arith.constant 0 : index
    %15 = vector.load %arg8[%c0_5, %c0_6] : memref<8x256xf32, #tpu.memory_space<vmem>>, vector<8x256xf32>
    %16 = arith.mulf %15, %10 : vector<8x256xf32>
    %cst_7 = arith.constant dense<0.000000e+00> : vector<8xf32>
    %17 = vector.multi_reduction <add>, %16, %cst_7 [1] : vector<8x256xf32> to vector<8xf32>
    %18 = vector.shape_cast %17 : vector<8xf32> to vector<8x1xf32>
    %c0_8 = arith.constant 0 : index
    %c0_9 = arith.constant 0 : index
    %19 = vector.load %arg9[%c0_8, %c0_9] : memref<8x1xf32, #tpu.memory_space<vmem>>, vector<8x1xf32>
    %cst_10 = arith.constant 2.000000e+00 : f32
    %20 = vector.broadcast %cst_10 : f32 to vector<8x1xf32>
    %21 = arith.mulf %20, %14 : vector<8x1xf32>
    %22 = arith.subf %21, %18 : vector<8x1xf32>
    %23 = arith.addf %19, %22 : vector<8x1xf32>
    %c0_11 = arith.constant 0 : index
    %c0_12 = arith.constant 0 : index
    %24 = vector.load %arg9[%c0_11, %c0_12] : memref<8x1xf32, #tpu.memory_space<vmem>>, vector<8x1xf32>
    tpu.vector_store %arg9[%c0_11, %c0_12], %23 {strides = array<i32>} : memref<8x1xf32, #tpu.memory_space<vmem>>, vector<8x1xf32>,
    %c0_i32_13 = arith.constant 0 : i32
    %25 = arith.cmpi eq, %arg1, %c0_i32_13 : i32
    %26 = arith.extui %25 : i1 to i32
    %c0_i32_14 = arith.constant 0 : i32
    %27 = arith.cmpi ne, %26, %c0_i32_14 : i32
    scf.if %27 {
      %c0_17 = arith.constant 0 : index
      %c0_18 = arith.constant 0 : index
      %c0_19 = arith.constant 0 : index
      %34 = vector.load %arg7[%c0_17, %c0_18, %c0_19] : memref<2x8x256xf32, #tpu.memory_space<vmem>>, vector<1x8x256xf32>
      %35 = vector.shape_cast %34 : vector<1x8x256xf32> to vector<8x256xf32>
      %36 = arith.mulf %35, %10 : vector<8x256xf32>
      %cst_20 = arith.constant dense<0.000000e+00> : vector<8xf32>
      %37 = vector.multi_reduction <add>, %36, %cst_20 [1] : vector<8x256xf32> to vector<8xf32>
      %38 = vector.shape_cast %37 : vector<8xf32> to vector<8x1xf32>
      %c0_21 = arith.constant 0 : index
      %c0_22 = arith.constant 0 : index
      %39 = vector.load %arg9[%c0_21, %c0_22] : memref<8x1xf32, #tpu.memory_space<vmem>>, vector<8x1xf32>
      %40 = arith.subf %38, %14 : vector<8x1xf32>
      %41 = arith.addf %39, %40 : vector<8x1xf32>
      %c0_23 = arith.constant 0 : index
      %c0_24 = arith.constant 0 : index
      %42 = vector.load %arg9[%c0_23, %c0_24] : memref<8x1xf32, #tpu.memory_space<vmem>>, vector<8x1xf32>
      tpu.vector_store %arg9[%c0_23, %c0_24], %41 {strides = array<i32>} : memref<8x1xf32, #tpu.memory_space<vmem>>, vector<8x1xf32>,
    } else {
    }
    %c1_i32 = arith.constant 1 : i32
    %28 = arith.cmpi eq, %arg1, %c1_i32 : i32
    %29 = arith.extui %28 : i1 to i32
    %c0_i32_15 = arith.constant 0 : i32
    %30 = arith.cmpi ne, %29, %c0_i32_15 : i32
    scf.if %30 {
      %c1 = arith.constant 1 : index
      %c0_17 = arith.constant 0 : index
      %c0_18 = arith.constant 0 : index
      %34 = vector.load %arg7[%c1, %c0_17, %c0_18] : memref<2x8x256xf32, #tpu.memory_space<vmem>>, vector<1x8x256xf32>
      %35 = vector.shape_cast %34 : vector<1x8x256xf32> to vector<8x256xf32>
      %36 = arith.mulf %35, %10 : vector<8x256xf32>
      %cst_19 = arith.constant dense<0.000000e+00> : vector<8xf32>
      %37 = vector.multi_reduction <add>, %36, %cst_19 [1] : vector<8x256xf32> to vector<8xf32>
      %38 = vector.shape_cast %37 : vector<8xf32> to vector<8x1xf32>
      %c0_20 = arith.constant 0 : index
      %c0_21 = arith.constant 0 : index
      %39 = vector.load %arg9[%c0_20, %c0_21] : memref<8x1xf32, #tpu.memory_space<vmem>>, vector<8x1xf32>
      %40 = arith.subf %38, %14 : vector<8x1xf32>
      %41 = arith.addf %39, %40 : vector<8x1xf32>
      %c0_22 = arith.constant 0 : index
      %c0_23 = arith.constant 0 : index
      %42 = vector.load %arg9[%c0_22, %c0_23] : memref<8x1xf32, #tpu.memory_space<vmem>>, vector<8x1xf32>
      tpu.vector_store %arg9[%c0_22, %c0_23], %41 {strides = array<i32>} : memref<8x1xf32, #tpu.memory_space<vmem>>, vector<8x1xf32>,
    } else {
    }
    %c3_i32 = arith.constant 3 : i32
    %31 = arith.cmpi eq, %arg1, %c3_i32 : i32
    %32 = arith.extui %31 : i1 to i32
    %c0_i32_16 = arith.constant 0 : i32
    %33 = arith.cmpi ne, %32, %c0_i32_16 : i32
    scf.if %33 {
      %cst_17 = arith.constant 0.000000e+00 : f32
      %34 = vector.broadcast %cst_17 : f32 to vector<1x1x128xf32>
      %c0_18 = arith.constant 0 : index
      %c0_19 = arith.constant 0 : index
      %35 = vector.load %arg9[%c0_18, %c0_19] : memref<8x1xf32, #tpu.memory_space<vmem>>, vector<8x1xf32>
      %36 = vector.shape_cast %35 : vector<8x1xf32> to vector<1x8x1xf32>
      %cst_20 = arith.constant dense<0.000000e+00> : vector<1xf32>
      %37 = vector.multi_reduction <add>, %36, %cst_20 [1, 2] : vector<1x8x1xf32> to vector<1xf32>
      %38 = vector.shape_cast %37 : vector<1xf32> to vector<1x1x1xf32>
      %39 = vector.extract %38[0, 0, 0] : f32 from vector<1x1x1xf32>
      %40 = vector.broadcast %39 : f32 to vector<1x1x128xf32>
      %41 = arith.addf %34, %40 : vector<1x1x128xf32>
      %c0_21 = arith.constant 0 : index
      %c0_22 = arith.constant 0 : index
      %c0_23 = arith.constant 0 : index
      %42 = vector.load %arg5[%c0_21, %c0_22, %c0_23] : memref<1x1x128xf32, #tpu.memory_space<vmem>>, vector<1x1x128xf32>
      tpu.vector_store %arg5[%c0_21, %c0_22, %c0_23], %41 {strides = array<i32>} : memref<1x1x128xf32, #tpu.memory_space<vmem>>, vector<1x1x128xf32>,
    } else {
    }
    return
  }
  func.func @transform_0(%arg0: i32, %arg1: i32) -> (i32, i32, i32) {
    %c0_i32 = arith.constant 0 : i32
    %c0_i32_0 = arith.constant 0 : i32
    %c0_i32_1 = arith.constant 0 : i32
    return %c0_i32, %arg0, %c0_i32_0 : i32, i32, i32
  }
  func.func @transform_1(%arg0: i32, %arg1: i32) -> (i32, i32, i32) {
    %c0_i32 = arith.constant 0 : i32
    %c0_i32_0 = arith.constant 0 : i32
    return %arg1, %arg0, %c0_i32 : i32, i32, i32
  }
  func.func @transform_2(%arg0: i32, %arg1: i32) -> (i32, i32) {
    %c0_i32 = arith.constant 0 : i32
    %c0_i32_0 = arith.constant 0 : i32
    %c0_i32_1 = arith.constant 0 : i32
    return %c0_i32, %c0_i32_0 : i32, i32
  }
  func.func @transform_3(%arg0: i32, %arg1: i32) -> (i32, i32, i32) {
    %c0_i32 = arith.constant 0 : i32
    %c0_i32_0 = arith.constant 0 : i32
    %c0_i32_1 = arith.constant 0 : i32
    return %arg0, %c0_i32, %c0_i32_0 : i32, i32, i32
  }
  func.func @transform_4(%arg0: i32, %arg1: i32) -> (i32, i32, i32) {
    %c0_i32 = arith.constant 0 : i32
    %c0_i32_0 = arith.constant 0 : i32
    %c0_i32_1 = arith.constant 0 : i32
    return %arg0, %c0_i32, %c0_i32_0 : i32, i32, i32
  }
}

</mosaic_0001>

<llo_original>
// kernel: tpu_custom_call.1
$region0: #{tpu_custom_call.1}
  #allocation0 [shape = 'u32[]', space=smem, size = 0x4, offset = 0x4, fixed_abs, tag = 'smem constant byte address 0x4 - core index']
  #allocation1 [shape = 'u32[144,128]{1,0:T(1,128)}', space=vmem, size = 0x12000, scoped, tag = 'internal scratch']
  #allocation2 [shape = 'f32[2,8,256]{2,1,0:T(8,128)}', space=vmem, size = 0x4000, scoped, tag = 'scratch operand']
  #allocation3 [shape = 'f32[8,256]{1,0:T(8,128)}', space=vmem, size = 0x2000, scoped, tag = 'scratch operand']
  #allocation4 [shape = 'f32[8,1]{1,0:T(8,128)}', space=vmem, size = 0x1000, scoped, tag = 'scratch operand']
  %s0 = inlined_call_operand.hbm [shape: f32[2,16,256], index: 0, kind: input, shape index: {}]
  %s1 = inlined_call_operand.hbm [shape: f32[4,16,256], index: 1, kind: input, shape index: {}]
  %s2 = inlined_call_operand.vmem [shape: f32[1,256], index: 2, kind: input, shape index: {}]
  %s3 = inlined_call_operand.hbm [shape: f32[2,1,128], index: 3, kind: output, shape index: {0}]
  %s4 = inlined_call_operand.hbm [shape: f32[2,1,256], index: 4, kind: output, shape index: {1}]
  %5 = xla_tuple %s3, %s4
  %s6 = sld [smem:[#allocation0]]
  $region77: #{tpu_custom_call.1} parent=0
    _
  %s8 = ssub.s32 1, %s6
  %s9 = scalar_select 0, %s8, %s6
  $region1: #{tpu_custom_call.1} parent=0
    #allocation5 [shape = 'u8[32768]{0}', space=vmem, size = 0x8000, scoped, tag = 'input window, operand 0']
    #allocation6 [shape = 's32[2]{0}', space=sflag, size = 0x8, scoped, tag = 'scoped memory for tpu_custom_call.1']
    #allocation7 [shape = 's32[2]{0}', space=sflag, size = 0x8, scoped, tag = 'scoped memory for tpu_custom_call.1']
    #allocation8 [shape = 'u8[16384]{0}', space=vmem, size = 0x4000, scoped, tag = 'input window, operand 1']
    #allocation9 [shape = 's32[2]{0}', space=sflag, size = 0x8, scoped, tag = 'scoped memory for tpu_custom_call.1']
    #allocation10 [shape = 'u8[1024]{0}', space=vmem, size = 0x400, scoped, tag = 'output window, operand 0']
    #allocation11 [shape = 'u8[2048]{0}', space=vmem, size = 0x800, scoped, tag = 'output window, operand 1']
    #allocation12 [shape = 's32[2]{0}', space=sflag, size = 0x8, scoped, tag = 'scoped memory for tpu_custom_call.1']
    %10 = vsyncpa [#allocation6], 0
    %s11 = scalar_lea.sflag [#allocation6], 1
    %12 = vsyncpa %s11, 0
    %13 = vsyncpa [#allocation9], 0
    %s14 = scalar_lea.sflag [#allocation9], 1
    %15 = vsyncpa %s14, 0
    %16 = vsyncpa [#allocation7], 0
    %s17 = scalar_lea.sflag [#allocation7], 1
    %18 = vsyncpa %s17, 0
    %19 = vsyncpa [#allocation12], 0
    %s20 = scalar_lea.sflag [#allocation12], 1
    %21 = vsyncpa %s20, 0
    loop: start=0, step=1, limit=10
    $region2: #{tpu_custom_call.1} parent=1 // loop_pre_header
      _
    $region3: #{tpu_custom_call.1} parent=1 // loop_header
      %s23 = sphi 0, %s27
      %p24 = scmp.ge.s32.totalorder %s23, 10
      %s30 = sphi 0, %s42
      %s31 = sphi 0, %s38
      %s32 = sphi 0, %s30
      %s33 = sphi 0, %s31
      %s34 = sphi 0, %s32
      %s35 = sphi 0, %s33
      %s45 = sphi 0, %s47
      %s48 = sphi 0, %s45
      %s49 = sphi 0, %s48
      %s65 = sphi 0, %s49
      %s73 = sphi 0, %s75
      %s76 = sphi 0, %s73
      %s77 = sphi 0, %s76
      %s93 = sphi 0, %s77
      %s97 = sphi 0, %s97
      %s99 = sphi 0, %s97
      %s100 = sphi 0, %s99
      %s114 = sphi 0, %s100
      %s120 = sphi 0, %s122
      %s123 = sphi 0, %s120
      %s124 = sphi 0, %s123
      %s140 = sphi 0, %s124
      %s146 = sphi 0, %s148
      %s149 = sphi 0, %s146
      %s150 = sphi 0, %s149
      %s166 = sphi 0, %s150
    $region4: #{tpu_custom_call.1} parent=1 // loop_header_branch
      %26 = sbr.rel (%p24) target = $region8
    $region5: #{tpu_custom_call.1} parent=1 // loop_body
      %s28 = ssub.s32 %s23, 1
      %s29 = ssub.s32 %s23, 2
      %s36 = sadd.s32 1, %s31
      %p37 = scmp.ge.s32.totalorder %s36, 4
      %s38 = scalar_select %p37, 0, %s36
      %s39 = sadd.s32 1, %s30
      %s40 = scalar_select %p37, %s39, %s30
      %p41 = scmp.ge.s32.totalorder %s40, 2
      %s42 = scalar_select %p41, 0, %s40
      %s43 = ssub.s32 %s30, %s42
      %p44 = scmp.eq.s32.totalorder %s43, 0
      %s46 = sadd.s32 %s45, 1
      %s47 = scalar_select %p44, %s45, %s46
      %p50 = pneg %p44
      %p51 = scmp.eq.s32.totalorder %s23, 7
      %p52 = por %p50, %p51
      %p53 = scmp.ne.s32.totalorder %s45, %s48
      %p54 = scmp.eq.s32.totalorder %s23, 0
      %p55 = por %p53, %p54
      %p56 = scmp.ne.s32.totalorder %s45, %s48
      %p57 = scmp.eq.s32.totalorder %s28, 7
      %p58 = por %p56, %p57
      %p59 = scmp.ne.s32.totalorder %s48, %s49
      %p60 = scmp.eq.s32.totalorder %s28, 0
      %p61 = por %p59, %p60
      %p62 = scmp.ne.s32.totalorder %s48, %s49
      %p63 = scmp.eq.s32.totalorder %s29, 7
      %p64 = por %p62, %p63
      %p66 = scmp.ne.s32.totalorder %s49, %s65
      %p67 = scmp.eq.s32.totalorder %s29, 0
      %p68 = por %p66, %p67
      %s69 = ssub.s32 %s31, %s38
      %s70 = ssub.s32 %s30, %s42
      %s71 = sor.u32 %s69, %s70
      %p72 = scmp.eq.s32.totalorder %s71, 0
      %s74 = sadd.s32 %s73, 1
      %s75 = scalar_select %p72, %s73, %s74
      %p78 = pneg %p72
      %p79 = scmp.eq.s32.totalorder %s23, 7
      %p80 = por %p78, %p79
      %p81 = scmp.ne.s32.totalorder %s73, %s76
      %p82 = scmp.eq.s32.totalorder %s23, 0
      %p83 = por %p81, %p82
      %p84 = scmp.ne.s32.totalorder %s73, %s76
      %p85 = scmp.eq.s32.totalorder %s28, 7
      %p86 = por %p84, %p85
      %p87 = scmp.ne.s32.totalorder %s76, %s77
      %p88 = scmp.eq.s32.totalorder %s28, 0
      %p89 = por %p87, %p88
      %p90 = scmp.ne.s32.totalorder %s76, %s77
      %p91 = scmp.eq.s32.totalorder %s29, 7
      %p92 = por %p90, %p91
      %p94 = scmp.ne.s32.totalorder %s77, %s93
      %p95 = scmp.eq.s32.totalorder %s29, 0
      %p96 = por %p94, %p95
      %s98 = sadd.s32 %s97, 1
      %p101 = scmp.eq.s32.totalorder %s23, 7
      %p102 = scmp.ne.s32.totalorder %s97, %s99
      %p103 = scmp.eq.s32.totalorder %s23, 0
      %p104 = por %p102, %p103
      %p105 = scmp.ne.s32.totalorder %s97, %s99
      %p106 = scmp.eq.s32.totalorder %s28, 7
      %p107 = por %p105, %p106
      %p108 = scmp.ne.s32.totalorder %s99, %s100
      %p109 = scmp.eq.s32.totalorder %s28, 0
      %p110 = por %p108, %p109
      %p111 = scmp.ne.s32.totalorder %s99, %s100
      %p112 = scmp.eq.s32.totalorder %s29, 7
      %p113 = por %p111, %p112
      %p115 = scmp.ne.s32.totalorder %s100, %s114
      %p116 = scmp.eq.s32.totalorder %s29, 0
      %p117 = por %p115, %p116
      %s118 = ssub.s32 %s30, %s42
      %p119 = scmp.eq.s32.totalorder %s118, 0
      %s121 = sadd.s32 %s120, 1
      %s122 = scalar_select %p119, %s120, %s121
      %p125 = pneg %p119
      %p126 = scmp.eq.s32.totalorder %s23, 7
      %p127 = por %p125, %p126
      %p128 = scmp.ne.s32.totalorder %s120, %s123
      %p129 = scmp.eq.s32.totalorder %s23, 0
      %p130 = por %p128, %p129
      %p131 = scmp.ne.s32.totalorder %s120, %s123
      %p132 = scmp.eq.s32.totalorder %s28, 7
      %p133 = por %p131, %p132
      %p134 = scmp.ne.s32.totalorder %s123, %s124
      %p135 = scmp.eq.s32.totalorder %s28, 0
      %p136 = por %p134, %p135
      %p137 = scmp.ne.s32.totalorder %s123, %s124
      %p138 = scmp.eq.s32.totalorder %s29, 7
      %p139 = por %p137, %p138
      %p141 = scmp.ne.s32.totalorder %s124, %s140
      %p142 = scmp.eq.s32.totalorder %s29, 0
      %p143 = por %p141, %p142
      %s144 = ssub.s32 %s30, %s42
      %p145 = scmp.eq.s32.totalorder %s144, 0
      %s147 = sadd.s32 %s146, 1
      %s148 = scalar_select %p145, %s146, %s147
      %p151 = pneg %p145
      %p152 = scmp.eq.s32.totalorder %s23, 7
      %p153 = por %p151, %p152
      %p154 = scmp.ne.s32.totalorder %s146, %s149
      %p155 = scmp.eq.s32.totalorder %s23, 0
      %p156 = por %p154, %p155
      %p157 = scmp.ne.s32.totalorder %s146, %s149
      %p158 = scmp.eq.s32.totalorder %s28, 7
      %p159 = por %p157, %p158
      %p160 = scmp.ne.s32.totalorder %s149, %s150
      %p161 = scmp.eq.s32.totalorder %s28, 0
      %p162 = por %p160, %p161
      %p163 = scmp.ne.s32.totalorder %s149, %s150
      %p164 = scmp.eq.s32.totalorder %s29, 7
      %p165 = por %p163, %p164
      %p167 = scmp.ne.s32.totalorder %s150, %s166
      %p168 = scmp.eq.s32.totalorder %s29, 0
      %p169 = por %p167, %p168
      %p170 = scmp.le.s32.totalorder 1, %s23
      %p171 = scmp.lt.s32.totalorder %s23, 9
      %p172 = pnand %p170, %p171
      %p173 = pneg %p172
      // Predicated region
      $region9: #{tpu_custom_call.1} parent=5 // pred_check
        _
      $region10: #{tpu_custom_call.1} parent=5 // pred_check_branch
        %175 = sbr.rel (%p172) target = $region12
      $region11: #{tpu_custom_call.1} parent=5 // pred_region
        %s176 = ssub.s32 %s23, 1
        // Predicated region
        $region13: #{tpu_custom_call.1} parent=11 // pred_check
          %p177 = pneg %p110
        $region14: #{tpu_custom_call.1} parent=11 // pred_check_branch
          %179 = sbr.rel (%p177) target = $region16
        $region15: #{tpu_custom_call.1} parent=11 // pred_region
          _
        $region16: #{tpu_custom_call.1} parent=11 // pred_fallthru
          _
      $region12: #{tpu_custom_call.1} parent=5 // pred_fallthru
        _
      %p180 = scmp.lt.s32.totalorder %s23, 8
      // Predicated region
      $region17: #{tpu_custom_call.1} parent=5 // pred_check
        %p181 = pneg %p180
      $region18: #{tpu_custom_call.1} parent=5 // pred_check_branch
        %183 = sbr.rel (%p181) target = $region20
      $region19: #{tpu_custom_call.1} parent=5 // pred_region
        // Predicated region
        $region21: #{tpu_custom_call.1} parent=19 // pred_check
          %p184 = pneg %p55
        $region22: #{tpu_custom_call.1} parent=19 // pred_check_branch
          %186 = sbr.rel (%p184) target = $region24
        $region23: #{tpu_custom_call.1} parent=19 // pred_region
          %s187 = sand.u32 %s45, 1
          %s188 = scalar_lea.sflag [#allocation6], %s187
          %s189 = sand.u32 %s45, 1
          %s190 = smul.addr %s189, 32
          %s191 = scalar_lea.vmem [#allocation5], %s190
          %s193 = ssub.s32 512, 512
          %194 = vsyncadd %s188, %s193
          %s195 = smul.addr %s30, 2
          %s196 = smul.addr %s195, 128
          %s197 = scalar_lea.hbm %s0, %s196
          %s198 = sshll.u32 %s191, 4
          %s199 = int_to_ptr.vmem [resolvable:$true] %s198
          %204 = dma.hbm_to_vmem [thread:$0]  %s197, 512, %s199, %s188, 512, 256, 16
        $region24: #{tpu_custom_call.1} parent=19 // pred_fallthru
          _
        // Predicated region
        $region25: #{tpu_custom_call.1} parent=19 // pred_check
          %p205 = pneg %p83
        $region26: #{tpu_custom_call.1} parent=19 // pred_check_branch
          %207 = sbr.rel (%p205) target = $region28
        $region27: #{tpu_custom_call.1} parent=19 // pred_region
          %s208 = sand.u32 %s73, 1
          %s209 = scalar_lea.sflag [#allocation9], %s208
          %s210 = sand.u32 %s73, 1
          %s211 = smul.addr %s210, 16
          %s212 = scalar_lea.vmem [#allocation8], %s211
          %s214 = ssub.s32 256, 256
          %215 = vsyncadd %s209, %s214
          %s216 = smul.addr %s30, 2
          %s217 = smul.addr %s31, 4
          %s218 = sadd.s32 %s216, %s217
          %s219 = smul.addr %s218, 128
          %s220 = scalar_lea.hbm %s1, %s219
          %s222 = sshll.u32 %s212, 4
          %s223 = int_to_ptr.vmem [resolvable:$true] %s222
          %225 = dma.hbm_to_vmem [thread:$0]  %s220, 256, %s223, %s209
        $region28: #{tpu_custom_call.1} parent=19 // pred_fallthru
          _
      $region20: #{tpu_custom_call.1} parent=5 // pred_fallthru
        _
      %p226 = scmp.le.s32.totalorder 1, %s23
      %p227 = scmp.lt.s32.totalorder %s23, 9
      %p228 = pnand %p226, %p227
      %p229 = pneg %p228
      // Predicated region
      $region29: #{tpu_custom_call.1} parent=5 // pred_check
        _
      $region30: #{tpu_custom_call.1} parent=5 // pred_check_branch
        %231 = sbr.rel (%p228) target = $region32
      $region31: #{tpu_custom_call.1} parent=5 // pred_region
        %s232 = ssub.s32 %s23, 1
        %s233 = sand.u32 %s48, 1
        %s234 = scalar_lea.sflag [#allocation6], %s233
        %s235 = sand.u32 %s48, 1
        %s236 = smul.addr %s235, 32
        %s237 = scalar_lea.vmem [#allocation5], %s236
        // Predicated region
        $region33: #{tpu_custom_call.1} parent=31 // pred_check
          %p238 = pneg %p61
        $region34: #{tpu_custom_call.1} parent=31 // pred_check_branch
          %240 = sbr.rel (%p238) target = $region36
        $region35: #{tpu_custom_call.1} parent=31 // pred_region
          %241 = dma.done %s234, 512
        $region36: #{tpu_custom_call.1} parent=31 // pred_fallthru
          _
        %s242 = sand.u32 %s76, 1
        %s243 = scalar_lea.sflag [#allocation9], %s242
        %s244 = sand.u32 %s76, 1
        %s245 = smul.addr %s244, 16
        %s246 = scalar_lea.vmem [#allocation8], %s245
        // Predicated region
        $region37: #{tpu_custom_call.1} parent=31 // pred_check
          %p247 = pneg %p89
        $region38: #{tpu_custom_call.1} parent=31 // pred_check_branch
          %249 = sbr.rel (%p247) target = $region40
        $region39: #{tpu_custom_call.1} parent=31 // pred_region
          %250 = dma.done %s243, 256
        $region40: #{tpu_custom_call.1} parent=31 // pred_fallthru
          _
        %s251 = sand.u32 %s48, 1
        %s252 = scalar_lea.sflag [#allocation6], %s251
        %s253 = sand.u32 %s48, 1
        %s254 = smul.addr %s253, 32
        %s255 = scalar_lea.vmem [#allocation5], %s254
        %p256 = pneg %p61
        %p257 = pneg %p58
        %s258 = sand.u32 %s76, 1
        %s259 = scalar_lea.sflag [#allocation9], %s258
        %s260 = sand.u32 %s76, 1
        %s261 = smul.addr %s260, 16
        %s262 = scalar_lea.vmem [#allocation8], %s261
        %p263 = pneg %p89
        %p264 = pneg %p86
        %p265 = pneg %p110
        %p266 = pneg %p107
        %p267 = pneg %p136
        %p268 = pneg %p133
        %s269 = sand.u32 %s123, 1
        %s270 = scalar_lea.sflag [#allocation7], %s269
        %s271 = sand.u32 %s123, 1
        %s272 = scalar_lea.vmem [#allocation10], %s271
        %p273 = pneg %p162
        %p274 = pneg %p159
        %s275 = sand.u32 %s149, 1
        %s276 = scalar_lea.sflag [#allocation12], %s275
        %s277 = sand.u32 %s149, 1
        %s278 = smul.addr %s277, 2
        %s279 = scalar_lea.vmem [#allocation11], %s278
        %p280 = scmp.eq.s32.totalorder %s33, 0
        // Predicated region
        $region41: #{tpu_custom_call.1} parent=31 // pred_check
          %p281 = pneg %p280
        $region42: #{tpu_custom_call.1} parent=31 // pred_check_branch
          %283 = sbr.rel (%p281) target = $region44
        $region43: #{tpu_custom_call.1} parent=31 // pred_region
          %vm284 = vcmask 7168
          %285 = vst.msk [vmem:[#allocation4] sm:$0xff] %vm284, 0.0
          %v286 = vld [vmem:[%s2] sm:$0x3]
          %v287 = vld [vmem:[%s237] sm:$0xff]
          %v288 = vld [vmem:[%s237 + $0x8] sm:$0xff]
          %v289 = vrot.slane %v287, 4
          %v290 = vadd.f32 %v287, %v289
          %v291 = vrot.slane %v290, 2
          %v292 = vadd.f32 %v290, %v291
          %v293 = vrot.slane %v292, 1
          %v294 = vadd.f32 %v292, %v293
          %v295 = vrot.slane %v288, 4
          %v296 = vadd.f32 %v288, %v295
          %v297 = vrot.slane %v296, 2
          %v298 = vadd.f32 %v296, %v297
          %v299 = vrot.slane %v298, 1
          %v300 = vadd.f32 %v298, %v299
          %v302 = vlaneseq
          %v303 = vshrl.u32 %v302, 7
          %v304 = vsub.s32 0, %v303
          %v305 = vrot.slane %v286, %v304
          %v306 = vlaneseq
          %v307 = vshrl.u32 %v306, 7
          %v308 = vsub.s32 1, %v307
          %v309 = vrot.slane %v286, %v308
          %v312 = vsub.f32 %v287, %v305
          %v313 = vsub.f32 %v288, %v309
          %v314 = vmul.f32 %v312, 25.0
          %v315 = vmul.f32 %v313, 25.0
          %v316 = vmax.f32 %v314, %v315
          %317 = vmax.xlane.f32.xlu0 %v316
          %v318 = vpop.xlane.xlu0 %317
          %v319 = vsub.f32 %v314, %v318
          %v320 = vsub.f32 %v315, %v318
          %v321 = vmul.f32 %v319, 1.442695
          %v322 = vpow.pop %v321
          %v323 = vmul.f32 %v320, 1.442695
          %v324 = vpow.pop %v323
          %v325 = vadd.f32 %v322, %v324
          %326 = vadd.xlane.f32.xlu0 %v325
          %v327 = vpop.xlane.xlu0 %326
          %v328 = vrcp.pop %v327
          %v329 = vmul.f32 %v322, %v328
          %v330 = vmul.f32 %v324, %v328
          %331 = vst [vmem:[#allocation2] sm:$0xff] %v329
          %332 = vst [vmem:[#allocation2 + $0x8] sm:$0xff] %v330
          %s333 = scalar_lea.vmem %s237, 16 [#allocation5]
          %v334 = vld [vmem:[%s333] sm:$0xff]
          %v335 = vld [vmem:[%s333 + $0x8] sm:$0xff]
          %v336 = vrot.slane %v334, 4
          %v337 = vadd.f32 %v334, %v336
          %v338 = vrot.slane %v337, 2
          %v339 = vadd.f32 %v337, %v338
          %v340 = vrot.slane %v339, 1
          %v341 = vadd.f32 %v339, %v340
          %v342 = vrot.slane %v335, 4
          %v343 = vadd.f32 %v335, %v342
          %v344 = vrot.slane %v343, 2
          %v345 = vadd.f32 %v343, %v344
          %v346 = vrot.slane %v345, 1
          %v347 = vadd.f32 %v345, %v346
          %v348 = vadd.f32 %v294, %v341
          %v349 = vadd.f32 %v300, %v347
          %v350 = vsub.f32 %v334, %v305
          %v351 = vsub.f32 %v335, %v309
          %v352 = vmul.f32 %v350, 25.0
          %v353 = vmul.f32 %v351, 25.0
          %v354 = vmax.f32 %v352, %v353
          %355 = vmax.xlane.f32.xlu0 %v354
          %v356 = vpop.xlane.xlu0 %355
          %v357 = vsub.f32 %v352, %v356
          %v358 = vsub.f32 %v353, %v356
          %v359 = vmul.f32 %v357, 1.442695
          %v360 = vpow.pop %v359
          %v361 = vmul.f32 %v358, 1.442695
          %v362 = vpow.pop %v361
          %v363 = vadd.f32 %v360, %v362
          %364 = vadd.xlane.f32.xlu0 %v363
          %v365 = vpop.xlane.xlu0 %364
          %v366 = vrcp.pop %v365
          %v367 = vmul.f32 %v360, %v366
          %v368 = vmul.f32 %v362, %v366
          %s369 = scalar_lea.vmem [#allocation2], 16
          %370 = vst [vmem:[%s369] sm:$0xff] %v367
          %371 = vst [vmem:[%s369 + $0x8] sm:$0xff] %v368
          %v372 = vadd.f32 %v329, %v367
          %v373 = vadd.f32 %v330, %v368
          %374 = vst [vmem:[#allocation3] sm:$0xff] %v372
          %375 = vst [vmem:[#allocation3 + $0x8] sm:$0xff] %v373
          %v378 = vcombine.low %v348, %v349
          %v380 = vunpack.c.l.s4 1966171168
          %v381 = vunpack.c.0.s8 %v380
          %v382 = vlaneseq
          %v383 = vshrl.u32 %v382, 7
          %v384 = vsub.s32 %v381, %v383
          %v385 = vrot.slane %v378, %v384
          %v387 = vunpack.c.l.s4 1966171168
          %v388 = vunpack.c.0.s8 %v387
          %v389 = vlaneseq
          %v390 = vshrl.u32 %v389, 7
          %v391 = vsub.s32 %v388, %v390
          %v392 = vrot.slane %v385, %v391
          %v394 = vlaneseq
          %vm395 = vcmp.ge.s32.totalorder %v394, 0
          %vm396 = vcmp.lt.s32.totalorder %v394, 256
          %vm397 = vmand %vm395, %vm396
          %398 = vst.msk [vmem:[%s279] sm:$0x3] %vm397, %v392
        $region44: #{tpu_custom_call.1} parent=31 // pred_fallthru
          _
        %v399 = vld [vmem:[%s246] sm:$0xff]
        %v400 = vld [vmem:[%s246 + $0x8] sm:$0xff]
        %v401 = vmul.f32 %v399, 10.0
        %v402 = vmul.f32 %v400, 10.0
        %v403 = vmax.f32 %v401, %v402
        %404 = vmax.xlane.f32.xlu0 %v403
        %v405 = vpop.xlane.xlu0 %404
        %v406 = vsub.f32 %v401, %v405
        %v407 = vsub.f32 %v402, %v405
        %v408 = vmul.f32 %v406, 1.442695
        %v409 = vpow.pop %v408
        %v410 = vmul.f32 %v407, 1.442695
        %v411 = vpow.pop %v410
        %v412 = vadd.f32 %v409, %v411
        %413 = vadd.xlane.f32.xlu0 %v412
        %v414 = vpop.xlane.xlu0 %413
        %v415 = vlog2.pop %v414
        %v416 = vmul.f32 %v415, 0.6931472
        %v417 = vld [vmem:[#allocation3] sm:$0xff]
        %v418 = vld [vmem:[#allocation3 + $0x8] sm:$0xff]
        %v419 = vmul.f32 %v417, %v406
        %v420 = vmul.f32 %v418, %v407
        %v421 = vadd.f32 %v419, %v420
        %422 = vadd.xlane.f32.xlu0 %v421
        %v423 = vpop.xlane.xlu0 %422
        %v424 = vld [vmem:[#allocation4] sm:$0xff]
        %v425 = vmul.f32 %v416, 2.0
        %v426 = vsub.f32 %v425, %v423
        %v427 = vadd.f32 %v424, %v426
        %vm428 = vcmask 7168
        %429 = vst.msk [vmem:[#allocation4] sm:$0xff] %vm428, %v427
        // Predicated region
        $region45: #{tpu_custom_call.1} parent=31 // pred_check
          %p430 = pneg %p280
        $region46: #{tpu_custom_call.1} parent=31 // pred_check_branch
          %432 = sbr.rel (%p430) target = $region48
        $region47: #{tpu_custom_call.1} parent=31 // pred_region
          %v433 = vld [vmem:[#allocation2] sm:$0xff]
          %v434 = vld [vmem:[#allocation2 + $0x8] sm:$0xff]
          %v435 = vmul.f32 %v433, %v406
          %v436 = vmul.f32 %v434, %v407
          %v437 = vadd.f32 %v435, %v436
          %438 = vadd.xlane.f32.xlu0 %v437
          %v439 = vpop.xlane.xlu0 %438
          %v440 = vld [vmem:[#allocation4] sm:$0xff]
          %v441 = vsub.f32 %v439, %v416
          %v442 = vadd.f32 %v440, %v441
          %443 = vst.msk [vmem:[#allocation4] sm:$0xff] %vm428, %v442
        $region48: #{tpu_custom_call.1} parent=31 // pred_fallthru
          _
        %p444 = scmp.eq.s32.totalorder %s33, 1
        // Predicated region
        $region49: #{tpu_custom_call.1} parent=31 // pred_check
          %p445 = pneg %p444
        $region50: #{tpu_custom_call.1} parent=31 // pred_check_branch
          %447 = sbr.rel (%p445) target = $region52
        $region51: #{tpu_custom_call.1} parent=31 // pred_region
          %s448 = scalar_lea.vmem [#allocation2], 16
          %v449 = vld [vmem:[%s448] sm:$0xff]
          %v450 = vld [vmem:[%s448 + $0x8] sm:$0xff]
          %v451 = vmul.f32 %v449, %v406
          %v452 = vmul.f32 %v450, %v407
          %v453 = vadd.f32 %v451, %v452
          %454 = vadd.xlane.f32.xlu0 %v453
          %v455 = vpop.xlane.xlu0 %454
          %v456 = vld [vmem:[#allocation4] sm:$0xff]
          %v457 = vsub.f32 %v455, %v416
          %v458 = vadd.f32 %v456, %v457
          %459 = vst.msk [vmem:[#allocation4] sm:$0xff] %vm428, %v458
        $region52: #{tpu_custom_call.1} parent=31 // pred_fallthru
          _
        %p460 = scmp.eq.s32.totalorder %s33, 3
        // Predicated region
        $region53: #{tpu_custom_call.1} parent=31 // pred_check
          %p461 = pneg %p460
        $region54: #{tpu_custom_call.1} parent=31 // pred_check_branch
          %463 = sbr.rel (%p461) target = $region56
        $region55: #{tpu_custom_call.1} parent=31 // pred_region
          %v464 = vld [vmem:[#allocation4] sm:$0xff]
          %v465 = vsel %vm428, %v464, 0.0
          %466 = vadd.xlane.f32.xlu0 %v465
          %v467 = vpop.xlane.xlu0 %466
          %v468 = vrot.slane %v467, 4
          %v469 = vadd.f32 %v467, %v468
          %v470 = vrot.slane %v469, 2
          %v471 = vadd.f32 %v469, %v470
          %v472 = vrot.slane %v471, 1
          %v473 = vadd.f32 %v471, %v472
          %s474 = vtos %v473
          %v475 = vstv %s474
          %v476 = vadd.f32 %v475, 0.0
          %477 = vst [vmem:[%s272] sm:$0x1] %v476
        $region56: #{tpu_custom_call.1} parent=31 // pred_fallthru
          _
        %s478 = sand.u32 %s123, 1
        %s479 = scalar_lea.sflag [#allocation7], %s478
        %s480 = sand.u32 %s123, 1
        %s481 = scalar_lea.vmem [#allocation10], %s480
        %s482 = sand.u32 %s149, 1
        %s483 = scalar_lea.sflag [#allocation12], %s482
        %s484 = sand.u32 %s149, 1
        %s485 = smul.addr %s484, 2
        %s486 = scalar_lea.vmem [#allocation11], %s485
        // Predicated region
        $region57: #{tpu_custom_call.1} parent=31 // pred_check
          %p487 = pneg %p133
        $region58: #{tpu_custom_call.1} parent=31 // pred_check_branch
          %489 = sbr.rel (%p487) target = $region60
        $region59: #{tpu_custom_call.1} parent=31 // pred_region
          %s491 = ssub.s32 16, 16
          %492 = vsyncadd %s479, %s491
          %s493 = smul.addr %s32, 16
          %s494 = scalar_lea.hbm %s3, %s493
          %s496 = sshll.u32 %s481, 4
          %s497 = int_to_ptr.vmem [resolvable:$true] %s496
          %499 = dma.vmem_to_hbm [thread:$0]  %s497, 16, %s494, %s479
        $region60: #{tpu_custom_call.1} parent=31 // pred_fallthru
          _
        // Predicated region
        $region61: #{tpu_custom_call.1} parent=31 // pred_check
          %p500 = pneg %p159
        $region62: #{tpu_custom_call.1} parent=31 // pred_check_branch
          %502 = sbr.rel (%p500) target = $region64
        $region63: #{tpu_custom_call.1} parent=31 // pred_region
          %s504 = ssub.s32 32, 32
          %505 = vsyncadd %s483, %s504
          %s506 = smul.addr %s32, 2
          %s507 = smul.addr %s506, 16
          %s508 = scalar_lea.hbm %s4, %s507
          %s510 = sshll.u32 %s486, 4
          %s511 = int_to_ptr.vmem [resolvable:$true] %s510
          %513 = dma.vmem_to_hbm [thread:$0]  %s511, 32, %s508, %s483
        $region64: #{tpu_custom_call.1} parent=31 // pred_fallthru
          _
      $region32: #{tpu_custom_call.1} parent=5 // pred_fallthru
        _
      %p514 = scmp.le.s32.totalorder 2, %s23
      // Predicated region
      $region65: #{tpu_custom_call.1} parent=5 // pred_check
        %p515 = pneg %p514
      $region66: #{tpu_custom_call.1} parent=5 // pred_check_branch
        %517 = sbr.rel (%p515) target = $region68
      $region67: #{tpu_custom_call.1} parent=5 // pred_region
        %s518 = ssub.s32 %s23, 2
        // Predicated region
        $region69: #{tpu_custom_call.1} parent=67 // pred_check
          %p519 = pneg %p139
        $region70: #{tpu_custom_call.1} parent=67 // pred_check_branch
          %521 = sbr.rel (%p519) target = $region72
        $region71: #{tpu_custom_call.1} parent=67 // pred_region
          %s522 = sand.u32 %s124, 1
          %s523 = scalar_lea.sflag [#allocation7], %s522
          %s524 = sand.u32 %s124, 1
          %s525 = scalar_lea.vmem [#allocation10], %s524
          %526 = dma.done %s523, 16
        $region72: #{tpu_custom_call.1} parent=67 // pred_fallthru
          _
        // Predicated region
        $region73: #{tpu_custom_call.1} parent=67 // pred_check
          %p527 = pneg %p165
        $region74: #{tpu_custom_call.1} parent=67 // pred_check_branch
          %529 = sbr.rel (%p527) target = $region76
        $region75: #{tpu_custom_call.1} parent=67 // pred_region
          %s530 = sand.u32 %s150, 1
          %s531 = scalar_lea.sflag [#allocation12], %s530
          %s532 = sand.u32 %s150, 1
          %s533 = smul.addr %s532, 2
          %s534 = scalar_lea.vmem [#allocation11], %s533
          %535 = dma.done %s531, 32
        $region76: #{tpu_custom_call.1} parent=67 // pred_fallthru
          _
      $region68: #{tpu_custom_call.1} parent=5 // pred_fallthru
        _
    $region6: #{tpu_custom_call.1} parent=1 // loop_footer
      %s27 = sadd.s32 1, %s23
    $region7: #{tpu_custom_call.1} parent=1 // loop_footer_branch
      %22 = sbr.rel target = $region3
    $region8: #{tpu_custom_call.1} parent=1 // loop_exit
      _
    %536 = vsyncpa [#allocation6], 1
    %s537 = scalar_lea.sflag [#allocation6], 1
    %538 = vsyncpa %s537, 1
    %539 = vsyncpa [#allocation9], 1
    %s540 = scalar_lea.sflag [#allocation9], 1
    %541 = vsyncpa %s540, 1
    %542 = vsyncpa [#allocation7], 1
    %s543 = scalar_lea.sflag [#allocation7], 1
    %544 = vsyncpa %s543, 1
    %545 = vsyncpa [#allocation12], 1
    %s546 = scalar_lea.sflag [#allocation12], 1
    %547 = vsyncpa %s546, 1

</llo_original>
